<compile_context>
chip_gen: v7x
topology: tpu7x:2x2x1
jax: 0.10.0
libtpu: 0.0.40
codegen_flags: <defaults>
</compile_context>

<pallas_src>
import functools

import jax
import jax.numpy as jnp
from jax.experimental import pallas as pl
from jax.experimental.pallas import tpu as pltpu


def actor_kernel(x_ref, w1_ref, b1_ref, w2_ref, b2_ref, out_ref):
    # x: (TB, obs); w1: (obs, hidden); b1: (1, hidden); w2: (hidden, act); b2: (1, act)
    x = x_ref[...]

    # h = relu(x @ w1 + b1) : (TB, hidden)
    h = jnp.dot(x, w1_ref[...], preferred_element_type=jnp.float32) + b1_ref[...]
    h = jnp.maximum(h, 0.0)

    # logits = h @ w2 + b2 : (TB, act)
    logits = jnp.dot(h, w2_ref[...], preferred_element_type=jnp.float32) + b2_ref[...]

    # Numerically stable softmax along the action dimension.
    m = jnp.max(logits, axis=-1, keepdims=True)
    e = jnp.exp(logits - m)
    denom = jnp.sum(e, axis=-1, keepdims=True)
    # EUP approximate reciprocal + one Newton-Raphson step => ~f32 accuracy
    # without occupying the VPU divide path.
    r = pl.reciprocal(denom, approx=True)
    r = r * (2.0 - denom * r)
    out_ref[...] = (e * r).astype(out_ref.dtype)


def _pick_batch_tile(B, block_b):
    """Batch tile: multiple of 8, >= 2 grid steps when B >= 16 (v7x megacore)."""
    block_b = max(8, (block_b // 8) * 8)          # Mosaic: second-minor dim % 8 == 0
    if B <= 8:
        return min(block_b, 8) if B <= block_b else block_b
    # Aim for an (at least) 2-way split of the batch, rounded up to 8 rows.
    half = 8 * pl.cdiv(pl.cdiv(B, 2), 8)
    return min(block_b, half)


def actor_forward(state, w1, b1, w2, b2, *, block_b=2048):
    """state: (B, obs); w1: (hidden, obs) PyTorch layout; b1: (hidden,) or (1, hidden);
       w2: (act, hidden); b2: (act,) or (1, act). Returns (B, act) action probs."""
    B, obs = state.shape
    hidden = w1.shape[0]
    act = w2.shape[0]

    # One-time glue per call (folds/fuses under jit): canonical MXU operand
    # layout and 2-D biases for TPU layout.
    w1t = jnp.transpose(w1)            # (obs, hidden)
    w2t = jnp.transpose(w2)            # (hidden, act)
    if b1.ndim == 1:
        b1 = b1.reshape(1, hidden)
    if b2.ndim == 1:
        b2 = b2.reshape(1, act)

    TB = _pick_batch_tile(B, block_b)
    grid = (pl.cdiv(B, TB),)

    # Rough per-step VMEM footprint (lane-padded f32, double-buffered x/out +
    # resident weights + ~3 materialized intermediates).  Only raise the scoped
    # VMEM limit when it nears v5e's 16 MiB default.
    pad = lambda n: 128 * pl.cdiv(n, 128)
    est_bytes = 4 * (
        2 * TB * pad(obs) + 2 * TB * pad(act) + 3 * TB * pad(max(hidden, act))
        + pad(obs) * pad(hidden) + pad(hidden) * pad(act) + pad(hidden) + pad(act)
    )
    vmem_limit = None
    if est_bytes > (14 << 20):
        vmem_limit = min(int(est_bytes * 1.25), 48 << 20)

    # Advisory cost hint for XLA's scheduler.
    cost = pl.CostEstimate(
        flops=2 * B * (obs * hidden + hidden * act),
        transcendentals=B * act,
        bytes_accessed=4 * (B * obs + B * act + hidden * obs + hidden + act * hidden + act),
    )

    return pl.pallas_call(
        actor_kernel,
        out_shape=jax.ShapeDtypeStruct((B, act), jnp.float32),
        grid=grid,
        in_specs=[
            pl.BlockSpec((TB, obs), lambda i: (i, 0)),         # x: tiled over batch
            pl.BlockSpec((obs, hidden), lambda i: (0, 0)),     # w1^T: resident
            pl.BlockSpec((1, hidden), lambda i: (0, 0)),       # b1: resident
            pl.BlockSpec((hidden, act), lambda i: (0, 0)),     # w2^T: resident
            pl.BlockSpec((1, act), lambda i: (0, 0)),          # b2: resident
        ],
        out_specs=pl.BlockSpec((TB, act), lambda i: (i, 0)),
        compiler_params=pltpu.CompilerParams(
            dimension_semantics=("parallel",),                 # v7x: 2 TCs share the batch
            vmem_limit_bytes=vmem_limit,
        ),
        cost_estimate=cost,
    )(state, w1t, b1, w2t, b2)


def _reference(state, w1, b1, w2, b2):
    h = jnp.maximum(state @ w1.T + b1.reshape(-1), 0.0)
    logits = h @ w2.T + b2.reshape(-1)
    return jax.nn.softmax(logits, axis=1)


if __name__ == "__main__":
    # Small shapes consistent with the module's forward.
    batch = 8
    observation_space = 32
    hidden_layers = 32
    action_space = 8

    key = jax.random.PRNGKey(0)
    k_x, k_w1, k_b1, k_w2, k_b2, k_x2, k_x3 = jax.random.split(key, 7)

    state = jax.random.normal(k_x, (batch, observation_space), dtype=jnp.float32)
    # PyTorch Linear layout: weights (out, in); biases (out,).
    w1 = jax.random.normal(k_w1, (hidden_layers, observation_space), jnp.float32) * 0.1
    b1 = jax.random.normal(k_b1, (hidden_layers,), jnp.float32) * 0.1
    w2 = jax.random.normal(k_w2, (action_space, hidden_layers), jnp.float32) * 0.1
    b2 = jax.random.normal(k_b2, (action_space,), jnp.float32) * 0.1

    fwd = jax.jit(functools.partial(actor_forward))

    probs = fwd(state, w1, b1, w2, b2)
    jax.block_until_ready(probs)
    probs_ref = _reference(state, w1, b1, w2, b2)
    assert jnp.allclose(probs, probs_ref, atol=1e-5), "mismatch vs reference (B=8)"
    assert jnp.allclose(jnp.sum(probs, axis=1), 1.0, atol=1e-5)

    # Multi-block grid with a partial last block (B=24, TB=16 -> grid=(2,)).
    state2 = jax.random.normal(k_x2, (24, observation_space), dtype=jnp.float32)
    probs2 = actor_forward(state2, w1, b1, w2, b2, block_b=16)
    jax.block_until_ready(probs2)
    probs2_ref = _reference(state2, w1, b1, w2, b2)
    assert jnp.allclose(probs2, probs2_ref, atol=1e-5), "mismatch vs reference (tiled/partial)"
    assert jnp.allclose(jnp.sum(probs2, axis=1), 1.0, atol=1e-5)

    # Larger batch exercising the default tile-picking / megacore split path.
    state3 = jax.random.normal(k_x3, (96, observation_space), dtype=jnp.float32)
    probs3 = actor_forward(state3, w1, b1, w2, b2)
    jax.block_until_ready(probs3)
    probs3_ref = _reference(state3, w1, b1, w2, b2)
    assert jnp.allclose(probs3, probs3_ref, atol=1e-5), "mismatch vs reference (B=96)"
    assert jnp.allclose(jnp.sum(probs3, axis=1), 1.0, atol=1e-5)

    print("KERNEL_OK")
</pallas_src>

<mosaic_0001>
module attributes {stable_mosaic.version = 11 : i64} {
  func.func @actor_kernel(%arg0: i32, %arg1: memref<8x32xf32, #tpu.memory_space<vmem>>, %arg2: memref<32x32xf32, #tpu.memory_space<vmem>>, %arg3: memref<1x32xf32, #tpu.memory_space<vmem>>, %arg4: memref<32x8xf32, #tpu.memory_space<vmem>>, %arg5: memref<1x8xf32, #tpu.memory_space<vmem>>, %arg6: memref<8x8xf32, #tpu.memory_space<vmem>>) attributes {dimension_semantics = [#tpu.dimension_semantics<parallel>], iteration_bounds = array<i64: 1>, scalar_prefetch = 0 : i64, scratch_operands = 0 : i64, tpu.core_type = #tpu.core_type<tc>, window_params = [{transform_indices = @transform_0, window_bounds = array<i64: 8, 32>}, {pipeline_mode = #tpu.pipeline_mode<synchronous>, transform_indices = @transform_1, window_bounds = array<i64: 32, 32>}, {pipeline_mode = #tpu.pipeline_mode<synchronous>, transform_indices = @transform_2, window_bounds = array<i64: 1, 32>}, {pipeline_mode = #tpu.pipeline_mode<synchronous>, transform_indices = @transform_3, window_bounds = array<i64: 32, 8>}, {pipeline_mode = #tpu.pipeline_mode<synchronous>, transform_indices = @transform_4, window_bounds = array<i64: 1, 8>}, {transform_indices = @transform_5, window_bounds = array<i64: 8, 8>}]} {
    %c0 = arith.constant 0 : index
    %c0_0 = arith.constant 0 : index
    %0 = vector.load %arg1[%c0, %c0_0] : memref<8x32xf32, #tpu.memory_space<vmem>>, vector<8x32xf32>
    %c0_1 = arith.constant 0 : index
    %c0_2 = arith.constant 0 : index
    %1 = vector.load %arg2[%c0_1, %c0_2] : memref<32x32xf32, #tpu.memory_space<vmem>>, vector<32x32xf32>
    %cst = arith.constant dense<0.000000e+00> : vector<8x32xf32>
    %2 = tpu.matmul %0, %1, %cst {dimension_numbers = #tpu.dot_dimension_numbers<[1], [0], [0], [1], [0, 0, 1, 1], [], []>} : vector<8x32xf32>, vector<32x32xf32>, vector<8x32xf32> -> vector<8x32xf32>
    %c0_3 = arith.constant 0 : index
    %c0_4 = arith.constant 0 : index
    %3 = vector.load %arg3[%c0_3, %c0_4] : memref<1x32xf32, #tpu.memory_space<vmem>>, vector<1x32xf32>
    %4 = vector.broadcast %3 : vector<1x32xf32> to vector<8x32xf32>
    %5 = arith.addf %2, %4 : vector<8x32xf32>
    %cst_5 = arith.constant 0.000000e+00 : f32
    %6 = vector.broadcast %cst_5 : f32 to vector<8x32xf32>
    %7 = arith.maximumf %5, %6 : vector<8x32xf32>
    %c0_6 = arith.constant 0 : index
    %c0_7 = arith.constant 0 : index
    %8 = vector.load %arg4[%c0_6, %c0_7] : memref<32x8xf32, #tpu.memory_space<vmem>>, vector<32x8xf32>
    %cst_8 = arith.constant dense<0.000000e+00> : vector<8x8xf32>
    %9 = tpu.matmul %7, %8, %cst_8 {dimension_numbers = #tpu.dot_dimension_numbers<[1], [0], [0], [1], [0, 0, 1, 1], [], []>} : vector<8x32xf32>, vector<32x8xf32>, vector<8x8xf32> -> vector<8x8xf32>
    %c0_9 = arith.constant 0 : index
    %c0_10 = arith.constant 0 : index
    %10 = vector.load %arg5[%c0_9, %c0_10] : memref<1x8xf32, #tpu.memory_space<vmem>>, vector<1x8xf32>
    %11 = vector.broadcast %10 : vector<1x8xf32> to vector<8x8xf32>
    %12 = arith.addf %9, %11 : vector<8x8xf32>
    %cst_11 = arith.constant dense<0xFF800000> : vector<8xf32>
    %13 = vector.multi_reduction <maximumf>, %12, %cst_11 [1] : vector<8x8xf32> to vector<8xf32>
    %14 = vector.shape_cast %13 : vector<8xf32> to vector<8x1xf32>
    %15 = vector.broadcast %14 : vector<8x1xf32> to vector<8x8xf32>
    %16 = arith.subf %12, %15 : vector<8x8xf32>
    %17 = math.exp %16 : vector<8x8xf32>
    %cst_12 = arith.constant dense<0.000000e+00> : vector<8xf32>
    %18 = vector.multi_reduction <add>, %17, %cst_12 [1] : vector<8x8xf32> to vector<8xf32>
    %19 = vector.shape_cast %18 : vector<8xf32> to vector<8x1xf32>
    %20 = tpu.reciprocal %19 {approx = true} : vector<8x1xf32> -> vector<8x1xf32>
    %21 = arith.mulf %19, %20 : vector<8x1xf32>
    %cst_13 = arith.constant 2.000000e+00 : f32
    %22 = vector.broadcast %cst_13 : f32 to vector<8x1xf32>
    %23 = arith.subf %22, %21 : vector<8x1xf32>
    %24 = arith.mulf %20, %23 : vector<8x1xf32>
    %25 = vector.broadcast %24 : vector<8x1xf32> to vector<8x8xf32>
    %26 = arith.mulf %17, %25 : vector<8x8xf32>
    %c0_14 = arith.constant 0 : index
    %c0_15 = arith.constant 0 : index
    %27 = vector.load %arg6[%c0_14, %c0_15] : memref<8x8xf32, #tpu.memory_space<vmem>>, vector<8x8xf32>
    tpu.vector_store %arg6[%c0_14, %c0_15], %26 {strides = array<i32>} : memref<8x8xf32, #tpu.memory_space<vmem>>, vector<8x8xf32>,
    return
  }
  func.func @transform_0(%arg0: i32) -> (i32, i32) {
    %c0_i32 = arith.constant 0 : i32
    %c0_i32_0 = arith.constant 0 : i32
    return %arg0, %c0_i32 : i32, i32
  }
  func.func @transform_1(%arg0: i32) -> (i32, i32) {
    %c0_i32 = arith.constant 0 : i32
    %c0_i32_0 = arith.constant 0 : i32
    %c0_i32_1 = arith.constant 0 : i32
    return %c0_i32, %c0_i32_0 : i32, i32
  }
  func.func @transform_2(%arg0: i32) -> (i32, i32) {
    %c0_i32 = arith.constant 0 : i32
    %c0_i32_0 = arith.constant 0 : i32
    %c0_i32_1 = arith.constant 0 : i32
    return %c0_i32, %c0_i32_0 : i32, i32
  }
  func.func @transform_3(%arg0: i32) -> (i32, i32) {
    %c0_i32 = arith.constant 0 : i32
    %c0_i32_0 = arith.constant 0 : i32
    %c0_i32_1 = arith.constant 0 : i32
    return %c0_i32, %c0_i32_0 : i32, i32
  }
  func.func @transform_4(%arg0: i32) -> (i32, i32) {
    %c0_i32 = arith.constant 0 : i32
    %c0_i32_0 = arith.constant 0 : i32
    %c0_i32_1 = arith.constant 0 : i32
    return %c0_i32, %c0_i32_0 : i32, i32
  }
  func.func @transform_5(%arg0: i32) -> (i32, i32) {
    %c0_i32 = arith.constant 0 : i32
    %c0_i32_0 = arith.constant 0 : i32
    return %arg0, %c0_i32 : i32, i32
  }
}

</mosaic_0001>

<llo_original>
// kernel: actor_forward.1
$region0: #{actor_forward.1}
  #allocation0 [shape = 'u32[]', space=smem, size = 0x4, offset = 0x4, fixed_abs, tag = 'smem constant byte address 0x4 - core index']
  #allocation1 [shape = 'u32[144,128]{1,0:T(1,128)}', space=vmem, size = 0x12000, scoped, tag = 'internal scratch']
  %s0 = inlined_call_operand.vmem [shape: f32[8,32], index: 0, kind: input, shape index: {}]
  %s1 = inlined_call_operand.vmem [shape: f32[32,32], index: 1, kind: input, shape index: {}]
  %s2 = inlined_call_operand.vmem [shape: f32[1,32], index: 2, kind: input, shape index: {}]
  %s3 = inlined_call_operand.vmem [shape: f32[32,8], index: 3, kind: input, shape index: {}]
  %s4 = inlined_call_operand.vmem [shape: f32[1,8], index: 4, kind: input, shape index: {}]
  %s5 = inlined_call_operand.hbm [shape: f32[8,8], index: 5, kind: output, shape index: {}]
  %s6 = sld [smem:[#allocation0]]
  $region30: #{actor_forward.1} parent=0
    _
  %s8 = ssub.s32 1, %s6
  %s9 = scalar_select 0, %s8, %s6
  $region1: #{actor_forward.1} parent=0
    #allocation2 [shape = 'u8[4096]{0}', space=vmem, size = 0x1000, scoped, tag = 'output window, operand 0, single buffered']
    #allocation3 [shape = 's32[1]{0}', space=sflag, size = 0x4, scoped, tag = 'scoped memory for actor_forward.1']
    %10 = vsyncpa [#allocation3], 0
    // Predicated region
    $region2: #{actor_forward.1} parent=1 // pred_check
      _
    $region3: #{actor_forward.1} parent=1 // pred_check_branch
      %12 = sbr.rel (0) target = $region5
    $region4: #{actor_forward.1} parent=1 // pred_region
      _
    $region5: #{actor_forward.1} parent=1 // pred_fallthru
      _
    // Predicated region
    $region6: #{actor_forward.1} parent=1 // pred_check
      _
    $region7: #{actor_forward.1} parent=1 // pred_check_branch
      %14 = sbr.rel (0) target = $region9
    $region8: #{actor_forward.1} parent=1 // pred_region
      _
    $region9: #{actor_forward.1} parent=1 // pred_fallthru
      _
    // Predicated region
    $region10: #{actor_forward.1} parent=1 // pred_check
      _
    $region11: #{actor_forward.1} parent=1 // pred_check_branch
      %16 = sbr.rel (0) target = $region13
    $region12: #{actor_forward.1} parent=1 // pred_region
      _
    $region13: #{actor_forward.1} parent=1 // pred_fallthru
      _
    // Predicated region
    $region14: #{actor_forward.1} parent=1 // pred_check
      _
    $region15: #{actor_forward.1} parent=1 // pred_check_branch
      %18 = sbr.rel (0) target = $region17
    $region16: #{actor_forward.1} parent=1 // pred_region
      _
    $region17: #{actor_forward.1} parent=1 // pred_fallthru
      _
    // Predicated region
    $region18: #{actor_forward.1} parent=1 // pred_check
      _
    $region19: #{actor_forward.1} parent=1 // pred_check_branch
      %20 = sbr.rel (0) target = $region21
    $region20: #{actor_forward.1} parent=1 // pred_region
      _
    $region21: #{actor_forward.1} parent=1 // pred_fallthru
      _
    %v21 = vld [vmem:[%s0] sm:$0xff]
    %v22 = vld [vmem:[%s1] sm:$0xff]
    %v23 = vld [vmem:[%s1 + $0x8] sm:$0xff]
    %v24 = vld [vmem:[%s1 + $0x10] sm:$0xff]
    %v25 = vld [vmem:[%s1 + $0x18] sm:$0xff]
    %v26 = vld [vmem:[%s2] sm:$0x1]
    %v28 = vlaneseq
    %v29 = vshrl.u32 %v28, 7
    %v30 = vsub.s32 0, %v29
    %v31 = vrot.slane %v26, %v30
    %vm33 = vcmask 261120
    %v35 = vsel %vm33, %v21, 0
    %37 = vmatprep.subr.mxu0 0.0
    %38 = vmatpush1.msra.mxu0 %v22
    %39 = vmatprep.subr.mxu0 0.0
    %40 = vmatpush1.msra.mxu0 %v23
    %41 = vmatprep.subr.mxu0 0.0
    %42 = vmatpush1.msra.mxu0 %v24
    %43 = vmatprep.subr.mxu0 0.0
    %44 = vmatpush1.msra.mxu0 %v25
    %45 = vmatprep.subr.mxu0 0.0
    %46 = vmatpush1.msra.mxu0 0.0
    %47 = vmatprep.subr.mxu0 0.0
    %48 = vmatpush1.msra.mxu0 0.0
    %49 = vmatprep.subr.mxu0 0.0
    %50 = vmatpush1.msra.mxu0 0.0
    %51 = vmatprep.subr.mxu0 0.0
    %52 = vmatpush1.msra.mxu0 0.0
    %53 = vmatprep.subr.mxu0 0.0
    %54 = vmatpush1.msra.mxu0 0.0
    %55 = vmatprep.subr.mxu0 0.0
    %56 = vmatpush1.msra.mxu0 0.0
    %57 = vmatprep.subr.mxu0 0.0
    %58 = vmatpush1.msra.mxu0 0.0
    %59 = vmatprep.subr.mxu0 0.0
    %60 = vmatpush1.msra.mxu0 0.0
    %61 = vmatprep.subr.mxu0 0.0
    %62 = vmatpush1.msra.mxu0 0.0
    %63 = vmatprep.subr.mxu0 0.0
    %64 = vmatpush1.msra.mxu0 0.0
    %65 = vmatprep.subr.mxu0 0.0
    %66 = vmatpush1.msra.mxu0 0.0
    %67 = vmatprep.subr.mxu0 0.0
    %68 = vmatpush1.msra.mxu0 0.0
    %69 = vmatprep.subr.mxu0 0.0
    %70 = vmatpush1.msra.mxu0 0.0
    %71 = vmatprep.subr.mxu0 0.0
    %72 = vmatpush1.msra.mxu0 0.0
    %73 = vmatprep.subr.mxu0 0.0
    %74 = vmatpush1.msra.mxu0 0.0
    %75 = vmatprep.subr.mxu0 0.0
    %76 = vmatpush1.msra.mxu0 0.0
    %77 = vmatprep.subr.mxu0 0.0
    %78 = vmatpush1.msra.mxu0 0.0
    %79 = vmatprep.subr.mxu0 0.0
    %80 = vmatpush1.msra.mxu0 0.0
    %81 = vmatprep.subr.mxu0 0.0
    %82 = vmatpush1.msra.mxu0 0.0
    %83 = vmatprep.subr.mxu0 0.0
    %84 = vmatpush1.msra.mxu0 0.0
    %85 = vmatprep.subr.mxu0 0.0
    %86 = vmatpush1.msra.mxu0 0.0
    %87 = vmatprep.subr.mxu0 0.0
    %88 = vmatpush1.msra.mxu0 0.0
    %89 = vmatprep.subr.mxu0 0.0
    %90 = vmatpush1.msra.mxu0 0.0
    %91 = vmatprep.subr.mxu0 0.0
    %92 = vmatpush1.msra.mxu0 0.0
    %93 = vmatprep.subr.mxu0 0.0
    %94 = vmatpush1.msra.mxu0 0.0
    %95 = vmatprep.subr.mxu0 0.0
    %96 = vmatpush1.msra.mxu0 0.0
    %97 = vmatprep.subr.mxu0 0.0
    %98 = vmatpush1.msra.mxu0 0.0
    %99 = vmatprep.subr.mxu0 0.0
    %100 = vmatpush1.msra.mxu0 0.0
    %101 = vmatprep.mubr.f32.mxu0 0.0
    %102 = vmatmul.mubr.f32.gmra.mrb[0].mxu0 %v35
    %v103 = vpop.f32.mrb[0].mxu0
    %v104 = vadd.f32 %v31, %v103
    %v105 = vpop.f32.mrb[0].mxu0
    %106 = vdwg.mxu0
    %v107 = vmax.f32 %v104, 0.0
    %v108 = vld [vmem:[%s3] sm:$0xff]
    %v109 = vld [vmem:[%s3 + $0x8] sm:$0xff]
    %v110 = vld [vmem:[%s3 + $0x10] sm:$0xff]
    %v111 = vld [vmem:[%s3 + $0x18] sm:$0xff]
    %v112 = vld [vmem:[%s4] sm:$0x1]
    %v114 = vlaneseq
    %v115 = vshrl.u32 %v114, 7
    %v116 = vsub.s32 0, %v115
    %v117 = vrot.slane %v112, %v116
    %v120 = vsel %vm33, %v107, 0
    %122 = vmatprep.subr.mxu0 0.0
    %123 = vmatpush1.msra.mxu0 %v108
    %124 = vmatprep.subr.mxu0 0.0
    %125 = vmatpush1.msra.mxu0 %v109
    %126 = vmatprep.subr.mxu0 0.0
    %127 = vmatpush1.msra.mxu0 %v110
    %128 = vmatprep.subr.mxu0 0.0
    %129 = vmatpush1.msra.mxu0 %v111
    %130 = vmatprep.subr.mxu0 0.0
    %131 = vmatpush1.msra.mxu0 0.0
    %132 = vmatprep.subr.mxu0 0.0
    %133 = vmatpush1.msra.mxu0 0.0
    %134 = vmatprep.subr.mxu0 0.0
    %135 = vmatpush1.msra.mxu0 0.0
    %136 = vmatprep.subr.mxu0 0.0
    %137 = vmatpush1.msra.mxu0 0.0
    %138 = vmatprep.subr.mxu0 0.0
    %139 = vmatpush1.msra.mxu0 0.0
    %140 = vmatprep.subr.mxu0 0.0
    %141 = vmatpush1.msra.mxu0 0.0
    %142 = vmatprep.subr.mxu0 0.0
    %143 = vmatpush1.msra.mxu0 0.0
    %144 = vmatprep.subr.mxu0 0.0
    %145 = vmatpush1.msra.mxu0 0.0
    %146 = vmatprep.subr.mxu0 0.0
    %147 = vmatpush1.msra.mxu0 0.0
    %148 = vmatprep.subr.mxu0 0.0
    %149 = vmatpush1.msra.mxu0 0.0
    %150 = vmatprep.subr.mxu0 0.0
    %151 = vmatpush1.msra.mxu0 0.0
    %152 = vmatprep.subr.mxu0 0.0
    %153 = vmatpush1.msra.mxu0 0.0
    %154 = vmatprep.subr.mxu0 0.0
    %155 = vmatpush1.msra.mxu0 0.0
    %156 = vmatprep.subr.mxu0 0.0
    %157 = vmatpush1.msra.mxu0 0.0
    %158 = vmatprep.subr.mxu0 0.0
    %159 = vmatpush1.msra.mxu0 0.0
    %160 = vmatprep.subr.mxu0 0.0
    %161 = vmatpush1.msra.mxu0 0.0
    %162 = vmatprep.subr.mxu0 0.0
    %163 = vmatpush1.msra.mxu0 0.0
    %164 = vmatprep.subr.mxu0 0.0
    %165 = vmatpush1.msra.mxu0 0.0
    %166 = vmatprep.subr.mxu0 0.0
    %167 = vmatpush1.msra.mxu0 0.0
    %168 = vmatprep.subr.mxu0 0.0
    %169 = vmatpush1.msra.mxu0 0.0
    %170 = vmatprep.subr.mxu0 0.0
    %171 = vmatpush1.msra.mxu0 0.0
    %172 = vmatprep.subr.mxu0 0.0
    %173 = vmatpush1.msra.mxu0 0.0
    %174 = vmatprep.subr.mxu0 0.0
    %175 = vmatpush1.msra.mxu0 0.0
    %176 = vmatprep.subr.mxu0 0.0
    %177 = vmatpush1.msra.mxu0 0.0
    %178 = vmatprep.subr.mxu0 0.0
    %179 = vmatpush1.msra.mxu0 0.0
    %180 = vmatprep.subr.mxu0 0.0
    %181 = vmatpush1.msra.mxu0 0.0
    %182 = vmatprep.subr.mxu0 0.0
    %183 = vmatpush1.msra.mxu0 0.0
    %184 = vmatprep.subr.mxu0 0.0
    %185 = vmatpush1.msra.mxu0 0.0
    %186 = vmatprep.mubr.f32.mxu0 0.0
    %187 = vmatmul.mubr.f32.gmra.mrb[0].mxu0 %v120
    %v188 = vpop.f32.mrb[0].mxu0
    %v189 = vadd.f32 %v117, %v188
    %v190 = vpop.f32.mrb[0].mxu0
    %191 = vdwg.mxu0
    %vm192 = vcmask 64512
    %v193 = vsel %vm192, %v189, -inf
    %194 = vmax.xlane.f32.xlu0 %v193
    %v195 = vpop.xlane.xlu0 %194
    %v196 = vsub.f32 %v189, %v195
    %v197 = vmul.f32 %v196, 1.442695
    %v198 = vpow.pop %v197
    %v199 = vsel %vm192, %v198, 0.0
    %200 = vadd.xlane.f32.xlu0 %v199
    %v201 = vpop.xlane.xlu0 %200
    %v202 = vrcp.pop %v201
    %v203 = vmul.f32 %v201, %v202
    %v204 = vsub.f32 2.0, %v203
    %v205 = vmul.f32 %v202, %v204
    %v206 = vmul.f32 %v198, %v205
    %207 = vst.msk [vmem:[#allocation2] sm:$0xff] %vm192, %v206
    // Predicated region
    $region22: #{actor_forward.1} parent=1 // pred_check
      _
    $region23: #{actor_forward.1} parent=1 // pred_check_branch
      %209 = sbr.rel (0) target = $region25
    $region24: #{actor_forward.1} parent=1 // pred_region
      %s211 = ssub.s32 128, 128
      %212 = vsyncadd [#allocation3], %s211
      %s214 = sshll.u32 [#allocation2], 4
      %s215 = int_to_ptr.vmem [resolvable:$true] %s214
      %217 = dma.vmem_to_hbm [thread:$0]  %s215, 128, %s5, [#allocation3]
    $region25: #{actor_forward.1} parent=1 // pred_fallthru
      _
    // Predicated region
    $region26: #{actor_forward.1} parent=1 // pred_check
      _
    $region27: #{actor_forward.1} parent=1 // pred_check_branch
      %219 = sbr.rel (0) target = $region29
    $region28: #{actor_forward.1} parent=1 // pred_region
      %220 = dma.done [#allocation3], 128
    $region29: #{actor_forward.1} parent=1 // pred_fallthru
      _
    %221 = vsyncpa [#allocation3], 1

</llo_original>
